<compile_context>
chip_gen: v6e
topology: v6e:2x2x1
jax: 0.10.0
libtpu: 0.0.40
codegen_flags: <defaults>
</compile_context>

<pallas_src>
import functools
import math

import jax
import jax.numpy as jnp
import numpy as np
from jax.experimental import pallas as pl
from jax.experimental.pallas import tpu as pltpu


# --------------------------- VMEM budget helpers --------------------------------

@functools.lru_cache(maxsize=None)
def _vmem_capacity_bytes():
    """Physical per-TensorCore VMEM (128 MiB v5e/v6e, 64 MiB v7x)."""
    try:
        cap = int(getattr(pltpu.get_tpu_info(), "vmem_capacity_bytes", 0) or 0)
        if cap > 0:
            return cap
    except Exception:
        pass
    return 64 << 20  # conservative fallback (v7x per-core VMEM)


def _vmem_limit_bytes():
    cap = _vmem_capacity_bytes()
    return min(cap, max((cap * 3) // 4, 32 << 20))


def _attn_vmem_budget_bytes():
    # Per-grid-step working-set budget (leave room for double-buffering + compiler).
    return max(_vmem_capacity_bytes() // 4, 8 << 20)


# ----------------------------- tile pickers --------------------------------------

def _round_up(x, m):
    return ((x + m - 1) // m) * m


def _pick_dim_tile(dim, preferred, align, cap):
    """Largest preferred tile dividing `dim`; else a bounded, aligned tile + pad."""
    for t in preferred:
        if t <= dim and dim % t == 0:
            return t, dim
    t = min(cap, _round_up(dim, align))
    return t, _round_up(dim, t)


def _pick_attn_tiles(h, s_q, s_kv, d_k, itemsize, budget, emit_p):
    """(hblk, tq, tkv) for the flash-attention grid, fitted to a VMEM budget."""
    hb_opts = [hb for hb in range(h, 0, -1)
               if h % hb == 0
               and (hb == h or (hb % 8 == 0 and (hb * d_k) % 128 == 0))]

    def seq_opts(dim):
        cands = [dim] + [t for t in (1024, 512, 256, 128, 64, 32, 16, 8)
                         if t < dim and dim % t == 0]
        return list(dict.fromkeys(cands))          # descending, deduped

    tq_opts = seq_opts(s_q)
    tkv_opts = [s_kv] if emit_p else seq_opts(s_kv)

    def step_bytes(hb, tq, tkv):
        db = 2 * itemsize                                   # double-buffered blocks
        qkv_in = db * hb * d_k * (tq + 2 * tkv)             # q + k + v blocks
        ctx_out = db * tq * hb * d_k
        p_out = db * hb * tq * tkv if emit_p else 0
        scratch = 4 * hb * tq * (d_k + 2 * 128)             # acc + lane-padded m, l
        interm = 2 * 4 * hb * tq * tkv                      # fp32 scores + exp
        return qkv_in + ctx_out + p_out + scratch + interm

    best = None
    for hb in hb_opts:
        for tq in tq_opts:
            for tkv in tkv_opts:
                if step_bytes(hb, tq, tkv) > budget:
                    continue
                score = (hb * min(tq, 512) * min(tkv, 512), hb, tq, tkv)
                if best is None or score > best[0]:
                    best = (score, (hb, tq, tkv))
    if best is not None:
        return best[1]
    # Nothing fits the budget: take the smallest legal config rather than silently
    # over-committing VMEM with larger head blocks.
    return hb_opts[-1], tq_opts[-1], tkv_opts[-1]


# ----------------------------- Pallas kernels ------------------------------------

def _linear_kernel(x_ref, w_ref, b_ref, o_ref, acc_ref):
    """One (tm, tn) output tile; K is reduced over the last grid axis."""
    k = pl.program_id(2)

    @pl.when(k == 0)
    def _():
        acc_ref[...] = jnp.zeros_like(acc_ref)

    acc_ref[...] += jnp.dot(x_ref[...], w_ref[...],
                            preferred_element_type=jnp.float32)

    @pl.when(k == pl.num_programs(2) - 1)
    def _():
        o_ref[...] = (acc_ref[...] + b_ref[...]).astype(o_ref.dtype)


def _flash_attention_kernel(q_ref, k_ref, v_ref, o_ref, *rest, scale, emit_p):
    """Flash-style online-softmax attention for one (batch, head-block, q-tile).

    q_ref: (tq, hblk, d_k); k_ref/v_ref: (tkv, hblk, d_k) (size-1 dims squeezed).
    o_ref: (tq, hblk*d_k) lane-dense context block.
    m/l/acc scratch persist across the KV grid axis (axis 3, "arbitrary")."""
    if emit_p:
        p_ref, m_sc, l_sc, acc_sc = rest
    else:
        m_sc, l_sc, acc_sc = rest

    ki = pl.program_id(3)

    @pl.when(ki == 0)
    def _init():
        m_sc[...] = jnp.full_like(m_sc, -jnp.inf)
        l_sc[...] = jnp.zeros_like(l_sc)
        acc_sc[...] = jnp.zeros_like(acc_sc)

    # Fold 1/sqrt(d_k) into q (O(tq*d_k) muls instead of O(tq*tkv)).
    q = q_ref[...] * scale                              # (tq, hblk, d_k)
    qh = jnp.transpose(q, (1, 0, 2))                    # (hblk, tq, d_k)
    kh = jnp.transpose(k_ref[...], (1, 0, 2))           # (hblk, tkv, d_k)
    vh = jnp.transpose(v_ref[...], (1, 0, 2))           # (hblk, tkv, d_k)

    # QK^T: contract last dims directly (no K transpose materialised in HBM).
    s = jnp.einsum("hqd,hkd->hqk", qh, kh,
                   preferred_element_type=jnp.float32)  # (hblk, tq, tkv)

    m_prev = m_sc[...]
    m_new = jnp.maximum(m_prev, jnp.max(s, axis=-1, keepdims=True))
    alpha = jnp.exp(m_prev - m_new)
    p = jnp.exp(s - m_new)                              # (hblk, tq, tkv)
    l_sc[...] = alpha * l_sc[...] + jnp.sum(p, axis=-1, keepdims=True)
    acc_sc[...] = alpha * acc_sc[...] + jnp.einsum(
        "hqk,hkd->hqd", p.astype(vh.dtype), vh,
        preferred_element_type=jnp.float32)
    m_sc[...] = m_new

    @pl.when(ki == pl.num_programs(3) - 1)
    def _finalize():
        l = l_sc[...]
        inv_l = pl.reciprocal(l, approx=True)           # EUP vrcp (free slot)
        inv_l = inv_l * (2.0 - l * inv_l)               # one Newton step -> ~fp32
        ctx = acc_sc[...] * inv_l                       # (hblk, tq, d_k)
        hblk, _, dk = ctx.shape
        # Lane-dense store: write each head's d_k columns of the (tq, hblk*d_k)
        # output block (heads merged exactly as .transpose(1,2).view(b,-1,h*d_k)).
        for hh in range(hblk):
            o_ref[:, hh * dk:(hh + 1) * dk] = ctx[hh].astype(o_ref.dtype)
        if emit_p:
            # Only valid when the KV axis is a single whole-row tile.
            p_ref[...] = (p * inv_l).astype(p_ref.dtype)


# ------------------------------ wrappers ------------------------------------------

def pallas_linear(x2d, w, b2d):
    """x2d: (M, K); w: (K, N) (pre-transposed once); b2d: (1, N)."""
    m, k = x2d.shape
    n = w.shape[1]
    tm, mp = _pick_dim_tile(m, (512, 256, 128, 64, 32, 16, 8), 8, 256)
    tk, kp = _pick_dim_tile(k, (1024, 512, 256, 128), 128, 512)
    tn, np_ = _pick_dim_tile(n, (512, 384, 256, 128), 128, 512)

    xp = x2d if (mp == m and kp == k) else jnp.pad(x2d, ((0, mp - m), (0, kp - k)))
    wp = w if (kp == k and np_ == n) else jnp.pad(w, ((0, kp - k), (0, np_ - n)))
    bp = b2d if np_ == n else jnp.pad(b2d, ((0, 0), (0, np_ - n)))

    grid = (mp // tm, np_ // tn, kp // tk)
    out = pl.pallas_call(
        _linear_kernel,
        out_shape=jax.ShapeDtypeStruct((mp, np_), x2d.dtype),
        grid=grid,
        in_specs=[
            pl.BlockSpec((tm, tk), lambda i, j, kk: (i, kk)),
            pl.BlockSpec((tk, tn), lambda i, j, kk: (kk, j)),
            pl.BlockSpec((1, tn), lambda i, j, kk: (0, j)),
        ],
        out_specs=pl.BlockSpec((tm, tn), lambda i, j, kk: (i, j)),
        scratch_shapes=[pltpu.VMEM((tm, tn), jnp.float32)],
        compiler_params=pltpu.CompilerParams(
            dimension_semantics=("parallel", "parallel", "arbitrary"),
            vmem_limit_bytes=_vmem_limit_bytes()),
    )(xp, wp, bp)
    if mp != m or np_ != n:
        out = out[:m, :n]
    return out


def pallas_attention(q5, k5, v5, sel, h, *, return_attn=False, tiles=None):
    """q5: (b, s_q, C, h, d_k); k5/v5: (b, s_kv, C, h, d_k) (may all be the same
    fused array); `sel` picks the chunk along C for q/k/v.

    Returns (ctx (b, s_q, h*d_k), p (b, h, s_q, s_kv) or None)."""
    b, s_q, _, _, d_k = q5.shape
    s_kv = k5.shape[1]
    dtype = q5.dtype
    itemsize = jnp.dtype(dtype).itemsize

    if tiles is not None:
        hblk, tq, tkv = tiles
    else:
        hblk, tq, tkv = _pick_attn_tiles(h, s_q, s_kv, d_k, itemsize,
                                         _attn_vmem_budget_bytes(), return_attn)
    if return_attn:
        tkv = s_kv  # whole-row softmax needed to emit normalised p_attn
    assert h % hblk == 0 and s_q % tq == 0 and s_kv % tkv == 0

    n_hb, n_q, n_kv = h // hblk, s_q // tq, s_kv // tkv
    scale = 1.0 / math.sqrt(d_k)
    kernel = functools.partial(_flash_attention_kernel,
                               scale=scale, emit_p=return_attn)

    def qmap(c):
        return lambda bi, hi, qi, ki: (bi, qi, c, hi, 0)

    def kvmap(c):
        return lambda bi, hi, qi, ki: (bi, ki, c, hi, 0)

    out_shapes = [jax.ShapeDtypeStruct((b, s_q, h * d_k), dtype)]
    out_specs = [pl.BlockSpec((None, tq, hblk * d_k),
                              lambda bi, hi, qi, ki: (bi, qi, hi))]
    if return_attn:
        out_shapes.append(jax.ShapeDtypeStruct((b, h, s_q, s_kv), dtype))
        out_specs.append(pl.BlockSpec((None, hblk, tq, tkv),
                                      lambda bi, hi, qi, ki: (bi, hi, qi, ki)))

    outs = pl.pallas_call(
        kernel,
        out_shape=tuple(out_shapes),
        grid=(b, n_hb, n_q, n_kv),
        in_specs=[
            pl.BlockSpec((None, tq, None, hblk, d_k), qmap(sel[0])),
            pl.BlockSpec((None, tkv, None, hblk, d_k), kvmap(sel[1])),
            pl.BlockSpec((None, tkv, None, hblk, d_k), kvmap(sel[2])),
        ],
        out_specs=tuple(out_specs),
        scratch_shapes=[
            pltpu.VMEM((hblk, tq, 1), jnp.float32),     # running max m
            pltpu.VMEM((hblk, tq, 1), jnp.float32),     # running denom l
            pltpu.VMEM((hblk, tq, d_k), jnp.float32),   # running context acc
        ],
        compiler_params=pltpu.CompilerParams(
            dimension_semantics=("parallel", "parallel", "parallel", "arbitrary"),
            vmem_limit_bytes=_vmem_limit_bytes()),
    )(q5, k5, v5)

    ctx = outs[0]
    attn = outs[1] if return_attn else None
    return ctx, attn


def prepare_params(params):
    """One-time weight layout: PyTorch (d_out, d_in) -> (d_in, d_out), fused QKV."""
    (wq, bq), (wk, bk), (wv, bv), (wo, bo) = params
    return dict(
        w_qkv=jnp.concatenate([wq.T, wk.T, wv.T], axis=1),
        b_qkv=jnp.concatenate([bq, bk, bv]).reshape(1, -1),
        w_q=wq.T, b_q=bq.reshape(1, -1),
        w_k=wk.T, b_k=bk.reshape(1, -1),
        w_v=wv.T, b_v=bv.reshape(1, -1),
        w_o=wo.T, b_o=bo.reshape(1, -1),
    )


def multi_headed_attention(query, key, value, prepared, h, *,
                           return_attn=False, attn_tiles=None):
    """Forward pass matching MultiHeadedAttention.forward (eval-mode dropout)."""
    b, s_q, d_model = query.shape
    assert d_model % h == 0
    d_k = d_model // h

    if (query is key) and (key is value):
        # Self-attention: one fused (d_model -> 3*d_model) projection.
        qkv = pallas_linear(query.reshape(b * s_q, d_model),
                            prepared["w_qkv"], prepared["b_qkv"])
        qkv5 = qkv.reshape(b, s_q, 3, h, d_k)
        q5 = k5 = v5 = qkv5          # same array; BlockSpec picks the q/k/v chunk
        sel = (0, 1, 2)
    else:
        s_kv = key.shape[1]
        q = pallas_linear(query.reshape(b * s_q, d_model),
                          prepared["w_q"], prepared["b_q"])
        kk = pallas_linear(key.reshape(b * s_kv, d_model),
                           prepared["w_k"], prepared["b_k"])
        v = pallas_linear(value.reshape(b * s_kv, d_model),
                          prepared["w_v"], prepared["b_v"])
        q5 = q.reshape(b, s_q, 1, h, d_k)
        k5 = kk.reshape(b, s_kv, 1, h, d_k)
        v5 = v.reshape(b, s_kv, 1, h, d_k)
        sel = (0, 0, 0)

    ctx, p_attn = pallas_attention(q5, k5, v5, sel, h,
                                   return_attn=return_attn, tiles=attn_tiles)
    # ctx is already (b, s_q, h*d_k) (heads merged, lane-dense).
    out = pallas_linear(ctx.reshape(b * s_q, d_model),
                        prepared["w_o"], prepared["b_o"])
    return out.reshape(b, s_q, d_model), p_attn


# ------------------------------ reference ----------------------------------------

def reference_mha(query, key, value, params, h):
    b, s, d_model = query.shape
    d_k = d_model // h
    hp = jax.lax.Precision.HIGHEST

    def lin(x, idx):
        w, bias = params[idx]
        return jnp.dot(x, w.T, precision=hp) + bias

    def split_heads(x):
        return x.reshape(b, s, h, d_k).transpose(0, 2, 1, 3)

    q = split_heads(lin(query, 0))
    k = split_heads(lin(key, 1))
    v = split_heads(lin(value, 2))
    scores = jnp.einsum("bhqd,bhkd->bhqk", q, k, precision=hp) / math.sqrt(d_k)
    p = jax.nn.softmax(scores, axis=-1)
    ctx = jnp.einsum("bhqk,bhkd->bhqd", p, v, precision=hp)
    ctx = ctx.transpose(0, 2, 1, 3).reshape(b, s, d_model)
    return lin(ctx, 3), p


# ------------------------------ main ----------------------------------------------

if __name__ == "__main__":
    B, S, D_MODEL, H = 2, 8, 32, 4

    key0 = jax.random.PRNGKey(0)
    keys = jax.random.split(key0, 12)

    # Deterministic parameter init for the 4 "BayesianLinear" layers (mean weights),
    # kept in PyTorch (d_out, d_in) layout; prepare_params lays them out once.
    params = []
    w_scale = 1.0 / math.sqrt(D_MODEL)
    for i in range(4):
        w = jax.random.normal(keys[i], (D_MODEL, D_MODEL), jnp.float32) * w_scale
        bias = jax.random.normal(keys[4 + i], (D_MODEL,), jnp.float32) * 0.01
        params.append((w, bias))
    prepared = prepare_params(params)

    query = jax.random.normal(keys[8], (B, S, D_MODEL), jnp.float32)
    key_in = jax.random.normal(keys[9], (B, S, D_MODEL), jnp.float32)
    value = jax.random.normal(keys[10], (B, S, D_MODEL), jnp.float32)

    # 1) Self-attention (fused QKV projection) with the attention matrix requested.
    out_s, attn_s = multi_headed_attention(query, query, query, prepared, H,
                                           return_attn=True)
    out_s = jax.block_until_ready(out_s)
    attn_s = jax.block_until_ready(attn_s)
    ref_out_s, ref_attn_s = reference_mha(query, query, query, params, H)
    np.testing.assert_allclose(np.asarray(out_s), np.asarray(ref_out_s),
                               rtol=2e-5, atol=2e-5)
    np.testing.assert_allclose(np.asarray(attn_s), np.asarray(ref_attn_s),
                               rtol=2e-5, atol=2e-5)

    # 2) Cross-attention (separate q/k/v projections) with the attention matrix.
    out_c, attn_c = multi_headed_attention(query, key_in, value, prepared, H,
                                           return_attn=True)
    out_c = jax.block_until_ready(out_c)
    attn_c = jax.block_until_ready(attn_c)
    ref_out_c, ref_attn_c = reference_mha(query, key_in, value, params, H)
    np.testing.assert_allclose(np.asarray(out_c), np.asarray(ref_out_c),
                               rtol=2e-5, atol=2e-5)
    np.testing.assert_allclose(np.asarray(attn_c), np.asarray(ref_attn_c),
                               rtol=2e-5, atol=2e-5)

    # 3) Flash path with real Q/KV tiling (multi-step online softmax), no p output.
    S2 = 128
    query2 = jax.random.normal(keys[11], (B, S2, D_MODEL), jnp.float32)
    out_f, attn_f = multi_headed_attention(query2, query2, query2, prepared, H,
                                           return_attn=False,
                                           attn_tiles=(H, 64, 32))
    out_f = jax.block_until_ready(out_f)
    assert attn_f is None
    ref_out_f, _ = reference_mha(query2, query2, query2, params, H)
    np.testing.assert_allclose(np.asarray(out_f), np.asarray(ref_out_f),
                               rtol=5e-5, atol=5e-5)

    print("KERNEL_OK")
</pallas_src>

<mosaic_0001>
module attributes {stable_mosaic.version = 11 : i64} {
  func.func @_linear_kernel(%arg0: i32, %arg1: i32, %arg2: i32, %arg3: memref<16x128xf32, #tpu.memory_space<vmem>>, %arg4: memref<128x128xf32, #tpu.memory_space<vmem>>, %arg5: memref<1x128xf32, #tpu.memory_space<vmem>>, %arg6: memref<16x128xf32, #tpu.memory_space<vmem>>, %arg7: memref<16x128xf32, #tpu.memory_space<vmem>>) attributes {dimension_semantics = [#tpu.dimension_semantics<parallel>, #tpu.dimension_semantics<parallel>, #tpu.dimension_semantics<arbitrary>], iteration_bounds = array<i64: 1, 1, 1>, scalar_prefetch = 0 : i64, scratch_operands = 1 : i64, tpu.core_type = #tpu.core_type<tc>, window_params = [{transform_indices = @transform_0, window_bounds = array<i64: 16, 128>}, {transform_indices = @transform_1, window_bounds = array<i64: 128, 128>}, {transform_indices = @transform_2, window_bounds = array<i64: 1, 128>}, {transform_indices = @transform_3, window_bounds = array<i64: 16, 128>}]} {
    %c0_i32 = arith.constant 0 : i32
    %0 = arith.cmpi eq, %arg2, %c0_i32 : i32
    %1 = arith.extui %0 : i1 to i32
    %c0_i32_0 = arith.constant 0 : i32
    %2 = arith.cmpi ne, %1, %c0_i32_0 : i32
    scf.if %2 {
      %cst_10 = arith.constant 0.000000e+00 : f32
      %12 = vector.broadcast %cst_10 : f32 to vector<16x128xf32>
      %c0_11 = arith.constant 0 : index
      %c0_12 = arith.constant 0 : index
      %13 = vector.load %arg7[%c0_11, %c0_12] : memref<16x128xf32, #tpu.memory_space<vmem>>, vector<16x128xf32>
      tpu.vector_store %arg7[%c0_11, %c0_12], %12 {strides = array<i32>} : memref<16x128xf32, #tpu.memory_space<vmem>>, vector<16x128xf32>,
    } else {
    }
    %c0 = arith.constant 0 : index
    %c0_1 = arith.constant 0 : index
    %3 = vector.load %arg7[%c0, %c0_1] : memref<16x128xf32, #tpu.memory_space<vmem>>, vector<16x128xf32>
    %c0_2 = arith.constant 0 : index
    %c0_3 = arith.constant 0 : index
    %4 = vector.load %arg3[%c0_2, %c0_3] : memref<16x128xf32, #tpu.memory_space<vmem>>, vector<16x128xf32>
    %c0_4 = arith.constant 0 : index
    %c0_5 = arith.constant 0 : index
    %5 = vector.load %arg4[%c0_4, %c0_5] : memref<128x128xf32, #tpu.memory_space<vmem>>, vector<128x128xf32>
    %cst = arith.constant dense<0.000000e+00> : vector<16x128xf32>
    %6 = tpu.matmul %4, %5, %cst {dimension_numbers = #tpu.dot_dimension_numbers<[1], [0], [0], [1], [0, 0, 1, 1], [], []>} : vector<16x128xf32>, vector<128x128xf32>, vector<16x128xf32> -> vector<16x128xf32>
    %7 = arith.addf %3, %6 : vector<16x128xf32>
    %c0_6 = arith.constant 0 : index
    %c0_7 = arith.constant 0 : index
    %8 = vector.load %arg7[%c0_6, %c0_7] : memref<16x128xf32, #tpu.memory_space<vmem>>, vector<16x128xf32>
    tpu.vector_store %arg7[%c0_6, %c0_7], %7 {strides = array<i32>} : memref<16x128xf32, #tpu.memory_space<vmem>>, vector<16x128xf32>,
    %c0_i32_8 = arith.constant 0 : i32
    %9 = arith.cmpi eq, %arg2, %c0_i32_8 : i32
    %10 = arith.extui %9 : i1 to i32
    %c0_i32_9 = arith.constant 0 : i32
    %11 = arith.cmpi ne, %10, %c0_i32_9 : i32
    scf.if %11 {
      %c0_10 = arith.constant 0 : index
      %c0_11 = arith.constant 0 : index
      %12 = vector.load %arg7[%c0_10, %c0_11] : memref<16x128xf32, #tpu.memory_space<vmem>>, vector<16x128xf32>
      %c0_12 = arith.constant 0 : index
      %c0_13 = arith.constant 0 : index
      %13 = vector.load %arg5[%c0_12, %c0_13] : memref<1x128xf32, #tpu.memory_space<vmem>>, vector<1x128xf32>
      %14 = vector.broadcast %13 : vector<1x128xf32> to vector<16x128xf32>
      %15 = arith.addf %12, %14 : vector<16x128xf32>
      %c0_14 = arith.constant 0 : index
      %c0_15 = arith.constant 0 : index
      %16 = vector.load %arg6[%c0_14, %c0_15] : memref<16x128xf32, #tpu.memory_space<vmem>>, vector<16x128xf32>
      tpu.vector_store %arg6[%c0_14, %c0_15], %15 {strides = array<i32>} : memref<16x128xf32, #tpu.memory_space<vmem>>, vector<16x128xf32>,
    } else {
    }
    return
  }
  func.func @transform_0(%arg0: i32, %arg1: i32, %arg2: i32) -> (i32, i32) {
    %c0_i32 = arith.constant 0 : i32
    return %arg0, %arg2 : i32, i32
  }
  func.func @transform_1(%arg0: i32, %arg1: i32, %arg2: i32) -> (i32, i32) {
    %c0_i32 = arith.constant 0 : i32
    return %arg2, %arg1 : i32, i32
  }
  func.func @transform_2(%arg0: i32, %arg1: i32, %arg2: i32) -> (i32, i32) {
    %c0_i32 = arith.constant 0 : i32
    %c0_i32_0 = arith.constant 0 : i32
    return %c0_i32, %arg1 : i32, i32
  }
  func.func @transform_3(%arg0: i32, %arg1: i32, %arg2: i32) -> (i32, i32) {
    %c0_i32 = arith.constant 0 : i32
    return %arg0, %arg1 : i32, i32
  }
}

</mosaic_0001>

<llo_original>
// kernel: tpu_custom_call.1
$region0: #{tpu_custom_call.1}
  #allocation0 [shape = 'u32[]', space=smem, size = 0x4, offset = 0x4, fixed_abs, tag = 'smem constant byte address 0x4 - core index']
  #allocation1 [shape = 'u32[144,128]{1,0:T(1,128)}', space=vmem, size = 0x12000, scoped, tag = 'internal scratch']
  #allocation2 [shape = 'f32[16,128]{1,0:T(8,128)}', space=vmem, size = 0x2000, scoped, tag = 'scratch operand']
  %s0 = inlined_call_operand.hbm [shape: f32[16,128], index: 0, kind: input, shape index: {}]
  %s1 = inlined_call_operand.hbm [shape: f32[128,128], index: 1, kind: input, shape index: {}]
  %s2 = inlined_call_operand.vmem [shape: f32[1,128], index: 2, kind: input, shape index: {}]
  %s3 = inlined_call_operand.hbm [shape: f32[16,128], index: 3, kind: output, shape index: {}]
  %s4 = sld [smem:[#allocation0]]
  $region38: #{tpu_custom_call.1} parent=0
    _
  %s6 = ssub.s32 1, %s4
  %s7 = scalar_select 0, %s6, %s4
  $region1: #{tpu_custom_call.1} parent=0
    #allocation3 [shape = 'u8[8192]{0}', space=vmem, size = 0x2000, scoped, tag = 'input window, operand 0, single buffered']
    #allocation4 [shape = 's32[1]{0}', space=sflag, size = 0x4, scoped, tag = 'scoped memory for tpu_custom_call.1']
    #allocation5 [shape = 's32[1]{0}', space=sflag, size = 0x4, scoped, tag = 'scoped memory for tpu_custom_call.1']
    #allocation6 [shape = 'u8[65536]{0}', space=vmem, size = 0x10000, scoped, tag = 'input window, operand 1, single buffered']
    #allocation7 [shape = 's32[1]{0}', space=sflag, size = 0x4, scoped, tag = 'scoped memory for tpu_custom_call.1']
    #allocation8 [shape = 'u8[8192]{0}', space=vmem, size = 0x2000, scoped, tag = 'output window, operand 0, single buffered']
    %8 = vsyncpa [#allocation4], 0
    %9 = vsyncpa [#allocation7], 0
    %10 = vsyncpa [#allocation5], 0
    // Predicated region
    $region2: #{tpu_custom_call.1} parent=1 // pred_check
      _
    $region3: #{tpu_custom_call.1} parent=1 // pred_check_branch
      %12 = sbr.rel (0) target = $region5
    $region4: #{tpu_custom_call.1} parent=1 // pred_region
      %s14 = ssub.s32 256, 256
      %15 = vsyncadd [#allocation4], %s14
      %s16 = sshll.u32 [#allocation3], 4
      %s17 = int_to_ptr.vmem [resolvable:$true] %s16
      %22 = dma.hbm_to_vmem [thread:$0]  %s0, 256, %s17, [#allocation4], 128, 128, 8
    $region5: #{tpu_custom_call.1} parent=1 // pred_fallthru
      _
    // Predicated region
    $region6: #{tpu_custom_call.1} parent=1 // pred_check
      _
    $region7: #{tpu_custom_call.1} parent=1 // pred_check_branch
      %24 = sbr.rel (0) target = $region9
    $region8: #{tpu_custom_call.1} parent=1 // pred_region
      %s26 = ssub.s32 2048, 2048
      %27 = vsyncadd [#allocation7], %s26
      %s28 = sshll.u32 [#allocation6], 4
      %s29 = int_to_ptr.vmem [resolvable:$true] %s28
      %34 = dma.hbm_to_vmem [thread:$0]  %s1, 2048, %s29, [#allocation7], 128, 128, 8
    $region9: #{tpu_custom_call.1} parent=1 // pred_fallthru
      _
    // Predicated region
    $region10: #{tpu_custom_call.1} parent=1 // pred_check
      _
    $region11: #{tpu_custom_call.1} parent=1 // pred_check_branch
      %36 = sbr.rel (0) target = $region13
    $region12: #{tpu_custom_call.1} parent=1 // pred_region
      _
    $region13: #{tpu_custom_call.1} parent=1 // pred_fallthru
      _
    // Predicated region
    $region14: #{tpu_custom_call.1} parent=1 // pred_check
      _
    $region15: #{tpu_custom_call.1} parent=1 // pred_check_branch
      %38 = sbr.rel (0) target = $region17
    $region16: #{tpu_custom_call.1} parent=1 // pred_region
      %39 = dma.done [#allocation4], 256
    $region17: #{tpu_custom_call.1} parent=1 // pred_fallthru
      _
    // Predicated region
    $region18: #{tpu_custom_call.1} parent=1 // pred_check
      _
    $region19: #{tpu_custom_call.1} parent=1 // pred_check_branch
      %41 = sbr.rel (0) target = $region21
    $region20: #{tpu_custom_call.1} parent=1 // pred_region
      %42 = dma.done [#allocation7], 2048
    $region21: #{tpu_custom_call.1} parent=1 // pred_fallthru
      _
    %p43 = scmp.eq.s32.totalorder 0, 0
    // Predicated region
    $region22: #{tpu_custom_call.1} parent=1 // pred_check
      %p44 = pneg %p43
    $region23: #{tpu_custom_call.1} parent=1 // pred_check_branch
      %46 = sbr.rel (%p44) target = $region25
    $region24: #{tpu_custom_call.1} parent=1 // pred_region
      %47 = vst [vmem:[#allocation2] sm:$0xff] 0.0
      %48 = vst [vmem:[#allocation2 + $0x8] sm:$0xff] 0.0
    $region25: #{tpu_custom_call.1} parent=1 // pred_fallthru
      _
    %v49 = vld [vmem:[#allocation2] sm:$0xff]
    %v50 = vld [vmem:[#allocation2 + $0x8] sm:$0xff]
    %v51 = vld [vmem:[#allocation3] sm:$0xff]
    %v52 = vld [vmem:[#allocation3 + $0x8] sm:$0xff]
    %v53 = vld [vmem:[#allocation6] sm:$0xff]
    %v54 = vld [vmem:[#allocation6 + $0x8] sm:$0xff]
    %v55 = vld [vmem:[#allocation6 + $0x10] sm:$0xff]
    %v56 = vld [vmem:[#allocation6 + $0x18] sm:$0xff]
    %v57 = vld [vmem:[#allocation6 + $0x20] sm:$0xff]
    %v58 = vld [vmem:[#allocation6 + $0x28] sm:$0xff]
    %v59 = vld [vmem:[#allocation6 + $0x30] sm:$0xff]
    %v60 = vld [vmem:[#allocation6 + $0x38] sm:$0xff]
    %v61 = vld [vmem:[#allocation6 + $0x40] sm:$0xff]
    %v62 = vld [vmem:[#allocation6 + $0x48] sm:$0xff]
    %v63 = vld [vmem:[#allocation6 + $0x50] sm:$0xff]
    %v64 = vld [vmem:[#allocation6 + $0x58] sm:$0xff]
    %v65 = vld [vmem:[#allocation6 + $0x60] sm:$0xff]
    %v66 = vld [vmem:[#allocation6 + $0x68] sm:$0xff]
    %v67 = vld [vmem:[#allocation6 + $0x70] sm:$0xff]
    %v68 = vld [vmem:[#allocation6 + $0x78] sm:$0xff]
    %69 = vmatprep.subr.mxu0 0.0
    %70 = vmatpush1.msra.mxu0 %v68
    %71 = vmatprep.subr.mxu0 0.0
    %72 = vmatpush1.msra.mxu0 %v67
    %73 = vmatprep.subr.mxu0 0.0
    %74 = vmatpush1.msra.mxu0 %v66
    %75 = vmatprep.subr.mxu0 0.0
    %76 = vmatpush1.msra.mxu0 %v65
    %77 = vmatprep.subr.mxu0 0.0
    %78 = vmatpush1.msra.mxu0 %v64
    %79 = vmatprep.subr.mxu0 0.0
    %80 = vmatpush1.msra.mxu0 %v63
    %81 = vmatprep.subr.mxu0 0.0
    %82 = vmatpush1.msra.mxu0 %v62
    %83 = vmatprep.subr.mxu0 0.0
    %84 = vmatpush1.msra.mxu0 %v61
    %85 = vmatprep.subr.mxu0 0.0
    %86 = vmatpush1.msra.mxu0 %v60
    %87 = vmatprep.subr.mxu0 0.0
    %88 = vmatpush1.msra.mxu0 %v59
    %89 = vmatprep.subr.mxu0 0.0
    %90 = vmatpush1.msra.mxu0 %v58
    %91 = vmatprep.subr.mxu0 0.0
    %92 = vmatpush1.msra.mxu0 %v57
    %93 = vmatprep.subr.mxu0 0.0
    %94 = vmatpush1.msra.mxu0 %v56
    %95 = vmatprep.subr.mxu0 0.0
    %96 = vmatpush1.msra.mxu0 %v55
    %97 = vmatprep.subr.mxu0 0.0
    %98 = vmatpush1.msra.mxu0 %v54
    %99 = vmatprep.subr.mxu0 0.0
    %100 = vmatpush1.msra.mxu0 %v53
    %101 = vmatprep.subr.mxu0 0.0
    %102 = vmatpush2.msra.mxu0 0.0
    %103 = vmatprep.subr.mxu0 0.0
    %104 = vmatpush2.msra.mxu0 0.0
    %105 = vmatprep.subr.mxu0 0.0
    %106 = vmatpush2.msra.mxu0 0.0
    %107 = vmatprep.subr.mxu0 0.0
    %108 = vmatpush2.msra.mxu0 0.0
    %109 = vmatprep.subr.mxu0 0.0
    %110 = vmatpush2.msra.mxu0 0.0
    %111 = vmatprep.subr.mxu0 0.0
    %112 = vmatpush2.msra.mxu0 0.0
    %113 = vmatprep.subr.mxu0 0.0
    %114 = vmatpush2.msra.mxu0 0.0
    %115 = vmatprep.subr.mxu0 0.0
    %116 = vmatpush2.msra.mxu0 0.0
    %117 = vmatprep.subr.mxu0 0.0
    %118 = vmatpush2.msra.mxu0 0.0
    %119 = vmatprep.subr.mxu0 0.0
    %120 = vmatpush2.msra.mxu0 0.0
    %121 = vmatprep.subr.mxu0 0.0
    %122 = vmatpush2.msra.mxu0 0.0
    %123 = vmatprep.subr.mxu0 0.0
    %124 = vmatpush2.msra.mxu0 0.0
    %125 = vmatprep.subr.mxu0 0.0
    %126 = vmatpush2.msra.mxu0 0.0
    %127 = vmatprep.subr.mxu0 0.0
    %128 = vmatpush2.msra.mxu0 0.0
    %129 = vmatprep.subr.mxu0 0.0
    %130 = vmatpush2.msra.mxu0 0.0
    %131 = vmatprep.subr.mxu0 0.0
    %132 = vmatpush2.msra.mxu0 0.0
    %133 = vmatprep.mubr.f32.mxu0 0.0
    %134 = vmatmul.mubr.f32.gmra.mxu0 %v51
    %v135 = vpop.f32.mrf.mxu0
    %v136 = vadd.f32 0.0, %v135
    %v137 = vpop.f32.mrf.mxu0
    %138 = vmatprep.mubr.f32.mxu0 0.0
    %139 = vmatmul.mubr.f32.gmra.mxu0 %v52
    %v140 = vpop.f32.mrf.mxu0
    %v141 = vadd.f32 0.0, %v140
    %v142 = vpop.f32.mrf.mxu0
    %143 = vdwg.mxu0
    %v144 = vadd.f32 %v49, %v136
    %v145 = vadd.f32 %v50, %v141
    %146 = vst [vmem:[#allocation2] sm:$0xff] %v144
    %147 = vst [vmem:[#allocation2 + $0x8] sm:$0xff] %v145
    // Predicated region
    $region26: #{tpu_custom_call.1} parent=1 // pred_check
      %p148 = pneg %p43
    $region27: #{tpu_custom_call.1} parent=1 // pred_check_branch
      %150 = sbr.rel (%p148) target = $region29
    $region28: #{tpu_custom_call.1} parent=1 // pred_region
      %v151 = vld [vmem:[#allocation2] sm:$0xff]
      %v152 = vld [vmem:[#allocation2 + $0x8] sm:$0xff]
      %v153 = vld [vmem:[%s2] sm:$0x1]
      %v155 = vlaneseq
      %v156 = vshrl.u32 %v155, 7
      %v157 = vsub.s32 0, %v156
      %v158 = vrot.slane %v153, %v157
      %v160 = vadd.f32 %v151, %v158
      %v161 = vadd.f32 %v152, %v158
      %162 = vst [vmem:[#allocation8] sm:$0xff] %v160
      %163 = vst [vmem:[#allocation8 + $0x8] sm:$0xff] %v161
    $region29: #{tpu_custom_call.1} parent=1 // pred_fallthru
      _
    // Predicated region
    $region30: #{tpu_custom_call.1} parent=1 // pred_check
      _
    $region31: #{tpu_custom_call.1} parent=1 // pred_check_branch
      %165 = sbr.rel (0) target = $region33
    $region32: #{tpu_custom_call.1} parent=1 // pred_region
      %s167 = ssub.s32 256, 256
      %168 = vsyncadd [#allocation5], %s167
      %s169 = sshll.u32 [#allocation8], 4
      %s170 = int_to_ptr.vmem [resolvable:$true] %s169
      %175 = dma.vmem_to_hbm [thread:$0]  %s170, 256, %s3, [#allocation5], 128, 128, 8
    $region33: #{tpu_custom_call.1} parent=1 // pred_fallthru
      _
    // Predicated region
    $region34: #{tpu_custom_call.1} parent=1 // pred_check
      _
    $region35: #{tpu_custom_call.1} parent=1 // pred_check_branch
      %177 = sbr.rel (0) target = $region37
    $region36: #{tpu_custom_call.1} parent=1 // pred_region
      %178 = dma.done [#allocation5], 256
    $region37: #{tpu_custom_call.1} parent=1 // pred_fallthru
      _
    %179 = vsyncpa [#allocation4], 1
    %180 = vsyncpa [#allocation7], 1
    %181 = vsyncpa [#allocation5], 1

</llo_original>
